<compile_context>
chip_gen: v7x
topology: tpu7x:2x2x1
jax: 0.10.0
libtpu: 0.0.40
codegen_flags: <defaults>
</compile_context>

<pallas_src>
import functools

import jax
import jax.numpy as jnp
from jax.experimental import pallas as pl
from jax.experimental.pallas import tpu as pltpu


def _predictor_kernel(xt_ref, w1_ref, b1_ref, w2_ref, b2_ref, o_ref):
    """One batch tile of the fused MLP, batch on the lane (minor) axis.

    xt_ref: [12, TB]  VMEM  -- x^T tile (lane-dense loads)
    w1_ref: [32, 12]  VMEM  -- layer1 weight, PyTorch [out, in] layout
    b1_ref: [32, 1]   VMEM  -- layer1 bias (broadcasts over lanes)
    w2_ref: [32, 1]   VMEM  -- layer2 weight column
    b2_ref: [1, 1]    SMEM  -- layer2 bias scalar
    o_ref : [1, TB]   VMEM  -- y^T tile (lane-dense, unmasked stores)
    """
    # Layer 1: h^T = W1 @ x^T  -> [32, TB] on the MXU, f32 accumulate.
    h = jnp.dot(w1_ref[...], xt_ref[...], preferred_element_type=jnp.float32)
    h = jnp.maximum(h + b1_ref[...], 0.0)                 # bias + ReLU (VPU)
    # Layer 2 (out_features == 1): VPU multiply + sublane reduction instead of
    # a 1-column MXU matmul:  y^T[0, b] = sum_f w2[f] * h^T[f, b] + b2.
    y = jnp.sum(h * w2_ref[...], axis=0, keepdims=True)   # [1, TB] (VPU/XLU)
    o_ref[...] = (y + b2_ref[0, 0]).astype(o_ref.dtype)


@functools.partial(jax.jit, static_argnames=("tile_b",))
def predictor_forward(x, w1, b1, w2, b2, *, tile_b=8192):
    """x: [B, 12] f32 -> [B, 1] f32 (same math as the PyTorch forward).

    Parameters use PyTorch shapes: w1 [32, 12], b1 [32], w2 [1, 32], b2 [1].
    """
    B, F = x.shape
    H = w1.shape[0]  # 32

    # Lane-dense batch tile: multiple of 128, capped at tile_b.
    block_b = min(int(tile_b), ((B + 127) // 128) * 128)
    n_tiles = pl.cdiv(B, block_b)
    Bp = n_tiles * block_b

    # Layout plumbing: batch on the minor (lane) axis, padded to the grid.
    xt = jnp.pad(x.astype(jnp.float32).T, ((0, 0), (0, Bp - B)))  # [12, Bp]
    w1m = w1.astype(jnp.float32)                                  # [32, 12]
    b1c = b1.reshape(H, 1).astype(jnp.float32)                    # [32, 1]
    w2c = w2.reshape(H, 1).astype(jnp.float32)                    # [32, 1]
    b2s = b2.reshape(1, 1).astype(jnp.float32)                    # [1, 1] SMEM

    out = pl.pallas_call(
        _predictor_kernel,
        out_shape=jax.ShapeDtypeStruct((1, Bp), jnp.float32),
        grid=(n_tiles,),
        in_specs=[
            pl.BlockSpec((F, block_b), lambda i: (0, i)),     # x^T tiles
            pl.BlockSpec((H, F), lambda i: (0, 0)),           # W1 (resident)
            pl.BlockSpec((H, 1), lambda i: (0, 0)),           # b1
            pl.BlockSpec((H, 1), lambda i: (0, 0)),           # w2 column
            pl.BlockSpec(memory_space=pltpu.MemorySpace.SMEM),  # b2 scalar
        ],
        out_specs=pl.BlockSpec((1, block_b), lambda i: (0, i)),
        compiler_params=pltpu.CompilerParams(
            dimension_semantics=("parallel",),   # shard batch across TCs (v7x)
        ),
    )(xt, w1m, b1c, w2c, b2s)

    # Back to PyTorch's [B, 1] layout, dropping the batch padding.
    return out[0, :B][:, None]


def init_params(key):
    """Deterministic init with PyTorch nn.Linear parameter shapes.

    layer1: weight [32, 12], bias [32]; layer2: weight [1, 32], bias [1].
    Uses PyTorch's uniform(-1/sqrt(fan_in), 1/sqrt(fan_in)) scheme.
    """
    k1, k2, k3, k4 = jax.random.split(key, 4)
    lim1 = 1.0 / jnp.sqrt(12.0)
    lim2 = 1.0 / jnp.sqrt(32.0)
    w1 = jax.random.uniform(k1, (32, 12), jnp.float32, -lim1, lim1)
    b1 = jax.random.uniform(k2, (32,), jnp.float32, -lim1, lim1)
    w2 = jax.random.uniform(k3, (1, 32), jnp.float32, -lim2, lim2)
    b2 = jax.random.uniform(k4, (1,), jnp.float32, -lim2, lim2)
    return w1, b1, w2, b2


if __name__ == "__main__":
    key = jax.random.PRNGKey(0)
    k_params, k_x = jax.random.split(key)

    w1, b1, w2, b2 = init_params(k_params)

    B = 8  # small demo batch
    x = jax.random.normal(k_x, (B, 12), dtype=jnp.float32)

    out = predictor_forward(x, w1, b1, w2, b2)
    out = jax.block_until_ready(out)

    # Pure-JAX reference (identical math to the PyTorch forward).
    ref = jnp.maximum(x @ w1.T + b1, 0.0) @ w2.T + b2
    assert out.shape == (B, 1), out.shape
    assert jnp.allclose(out, ref, atol=1e-5, rtol=1e-5), "mismatch vs reference"

    print("KERNEL_OK")
</pallas_src>

<mosaic_0001>
module attributes {stable_mosaic.version = 11 : i64} {
  func.func @_predictor_kernel(%arg0: i32, %arg1: memref<12x128xf32, #tpu.memory_space<vmem>>, %arg2: memref<32x12xf32, #tpu.memory_space<vmem>>, %arg3: memref<32x1xf32, #tpu.memory_space<vmem>>, %arg4: memref<32x1xf32, #tpu.memory_space<vmem>>, %arg5: memref<1x1xf32, #tpu.memory_space<smem>>, %arg6: memref<1x128xf32, #tpu.memory_space<vmem>>) attributes {dimension_semantics = [#tpu.dimension_semantics<parallel>], iteration_bounds = array<i64: 1>, scalar_prefetch = 0 : i64, scratch_operands = 0 : i64, tpu.core_type = #tpu.core_type<tc>, window_params = [{transform_indices = @transform_0, window_bounds = array<i64: 12, 128>}, {pipeline_mode = #tpu.pipeline_mode<synchronous>, transform_indices = @transform_1, window_bounds = array<i64: 32, 12>}, {pipeline_mode = #tpu.pipeline_mode<synchronous>, transform_indices = @transform_2, window_bounds = array<i64: 32, 1>}, {pipeline_mode = #tpu.pipeline_mode<synchronous>, transform_indices = @transform_3, window_bounds = array<i64: 32, 1>}, {transform_indices = @transform_4, window_bounds = array<i64: 1, 1>}, {transform_indices = @transform_5, window_bounds = array<i64: 1, 128>}]} {
    %c0 = arith.constant 0 : index
    %c0_0 = arith.constant 0 : index
    %0 = vector.load %arg2[%c0, %c0_0] : memref<32x12xf32, #tpu.memory_space<vmem>>, vector<32x12xf32>
    %c0_1 = arith.constant 0 : index
    %c0_2 = arith.constant 0 : index
    %1 = vector.load %arg1[%c0_1, %c0_2] : memref<12x128xf32, #tpu.memory_space<vmem>>, vector<12x128xf32>
    %cst = arith.constant dense<0.000000e+00> : vector<32x128xf32>
    %2 = tpu.matmul %0, %1, %cst {dimension_numbers = #tpu.dot_dimension_numbers<[1], [0], [0], [1], [0, 0, 1, 1], [], []>} : vector<32x12xf32>, vector<12x128xf32>, vector<32x128xf32> -> vector<32x128xf32>
    %c0_3 = arith.constant 0 : index
    %c0_4 = arith.constant 0 : index
    %3 = vector.load %arg3[%c0_3, %c0_4] : memref<32x1xf32, #tpu.memory_space<vmem>>, vector<32x1xf32>
    %4 = vector.broadcast %3 : vector<32x1xf32> to vector<32x128xf32>
    %5 = arith.addf %2, %4 : vector<32x128xf32>
    %cst_5 = arith.constant 0.000000e+00 : f32
    %6 = vector.broadcast %cst_5 : f32 to vector<32x128xf32>
    %7 = arith.maximumf %5, %6 : vector<32x128xf32>
    %c0_6 = arith.constant 0 : index
    %c0_7 = arith.constant 0 : index
    %8 = vector.load %arg4[%c0_6, %c0_7] : memref<32x1xf32, #tpu.memory_space<vmem>>, vector<32x1xf32>
    %9 = vector.broadcast %8 : vector<32x1xf32> to vector<32x128xf32>
    %10 = arith.mulf %7, %9 : vector<32x128xf32>
    %cst_8 = arith.constant dense<0.000000e+00> : vector<128xf32>
    %11 = vector.multi_reduction <add>, %10, %cst_8 [0] : vector<32x128xf32> to vector<128xf32>
    %12 = vector.shape_cast %11 : vector<128xf32> to vector<1x128xf32>
    %c0_9 = arith.constant 0 : index
    %c0_10 = arith.constant 0 : index
    %13 = memref.load %arg5[%c0_9, %c0_10] : memref<1x1xf32, #tpu.memory_space<smem>>
    %14 = vector.broadcast %13 : f32 to vector<1x128xf32>
    %15 = arith.addf %12, %14 : vector<1x128xf32>
    %c0_11 = arith.constant 0 : index
    %c0_12 = arith.constant 0 : index
    %16 = vector.load %arg6[%c0_11, %c0_12] : memref<1x128xf32, #tpu.memory_space<vmem>>, vector<1x128xf32>
    tpu.vector_store %arg6[%c0_11, %c0_12], %15 {strides = array<i32>} : memref<1x128xf32, #tpu.memory_space<vmem>>, vector<1x128xf32>,
    return
  }
  func.func @transform_0(%arg0: i32) -> (i32, i32) {
    %c0_i32 = arith.constant 0 : i32
    %c0_i32_0 = arith.constant 0 : i32
    return %c0_i32, %arg0 : i32, i32
  }
  func.func @transform_1(%arg0: i32) -> (i32, i32) {
    %c0_i32 = arith.constant 0 : i32
    %c0_i32_0 = arith.constant 0 : i32
    %c0_i32_1 = arith.constant 0 : i32
    return %c0_i32, %c0_i32_0 : i32, i32
  }
  func.func @transform_2(%arg0: i32) -> (i32, i32) {
    %c0_i32 = arith.constant 0 : i32
    %c0_i32_0 = arith.constant 0 : i32
    %c0_i32_1 = arith.constant 0 : i32
    return %c0_i32, %c0_i32_0 : i32, i32
  }
  func.func @transform_3(%arg0: i32) -> (i32, i32) {
    %c0_i32 = arith.constant 0 : i32
    %c0_i32_0 = arith.constant 0 : i32
    %c0_i32_1 = arith.constant 0 : i32
    return %c0_i32, %c0_i32_0 : i32, i32
  }
  func.func @transform_4(%arg0: i32) -> (i32, i32) {
    %c0_i32 = arith.constant 0 : i32
    %c0_i32_0 = arith.constant 0 : i32
    %c0_i32_1 = arith.constant 0 : i32
    return %c0_i32, %c0_i32_0 : i32, i32
  }
  func.func @transform_5(%arg0: i32) -> (i32, i32) {
    %c0_i32 = arith.constant 0 : i32
    %c0_i32_0 = arith.constant 0 : i32
    return %c0_i32, %arg0 : i32, i32
  }
}

</mosaic_0001>

<llo_original>
// kernel: predictor_forward.1
$region0: #{predictor_forward.1}
  #allocation0 [shape = 'u32[]', space=smem, size = 0x4, offset = 0x4, fixed_abs, tag = 'smem constant byte address 0x4 - core index']
  #allocation1 [shape = 'u32[144,128]{1,0:T(1,128)}', space=vmem, size = 0x12000, scoped, tag = 'internal scratch']
  #allocation2 [shape = 'f32[1,1]{1,0:T(1,128)S(6)}', space=smem, size = 0x200, scoped, tag = 'scoped memory for predictor_forward.1']
  %s0 = inlined_call_operand.vmem [shape: f32[12,128], index: 0, kind: input, shape index: {}]
  %s1 = inlined_call_operand.vmem [shape: f32[32,12], index: 1, kind: input, shape index: {}]
  %s2 = inlined_call_operand.vmem [shape: f32[32,1], index: 2, kind: input, shape index: {}]
  %s3 = inlined_call_operand.vmem [shape: f32[32,1], index: 3, kind: input, shape index: {}]
  %s4 = inlined_call_operand.<no memory space> [shape: f32[1,1], index: 4, kind: input, shape index: {}]
  %s5 = inlined_call_operand.vmem [shape: f32[1,128], index: 5, kind: output, shape index: {}]
  %s6 = sld [smem:[#allocation0]]
  $region30: #{predictor_forward.1} parent=0
    _
  %s8 = ssub.s32 1, %s6
  %s9 = scalar_select 0, %s8, %s6
  %10 = sst [smem:[#allocation2]] %s4
  // Predicated region
  $region2: #{predictor_forward.1} parent=0 // pred_check
    _
  $region3: #{predictor_forward.1} parent=0 // pred_check_branch
    %12 = sbr.rel (0) target = $region5
  $region4: #{predictor_forward.1} parent=0 // pred_region
    _
  $region5: #{predictor_forward.1} parent=0 // pred_fallthru
    _
  // Predicated region
  $region6: #{predictor_forward.1} parent=0 // pred_check
    _
  $region7: #{predictor_forward.1} parent=0 // pred_check_branch
    %14 = sbr.rel (0) target = $region9
  $region8: #{predictor_forward.1} parent=0 // pred_region
    _
  $region9: #{predictor_forward.1} parent=0 // pred_fallthru
    _
  // Predicated region
  $region10: #{predictor_forward.1} parent=0 // pred_check
    _
  $region11: #{predictor_forward.1} parent=0 // pred_check_branch
    %16 = sbr.rel (0) target = $region13
  $region12: #{predictor_forward.1} parent=0 // pred_region
    _
  $region13: #{predictor_forward.1} parent=0 // pred_fallthru
    _
  // Predicated region
  $region14: #{predictor_forward.1} parent=0 // pred_check
    _
  $region15: #{predictor_forward.1} parent=0 // pred_check_branch
    %18 = sbr.rel (0) target = $region17
  $region16: #{predictor_forward.1} parent=0 // pred_region
    _
  $region17: #{predictor_forward.1} parent=0 // pred_fallthru
    _
  // Predicated region
  $region18: #{predictor_forward.1} parent=0 // pred_check
    _
  $region19: #{predictor_forward.1} parent=0 // pred_check_branch
    %20 = sbr.rel (0) target = $region21
  $region20: #{predictor_forward.1} parent=0 // pred_region
    _
  $region21: #{predictor_forward.1} parent=0 // pred_fallthru
    _
  %v21 = vld [vmem:[%s1] sm:$0xff]
  %v22 = vld [vmem:[%s1 + $0x8] sm:$0xff]
  %v23 = vld [vmem:[%s1 + $0x10] sm:$0xff]
  %v24 = vld [vmem:[%s1 + $0x18] sm:$0xff]
  %v25 = vld [vmem:[%s0] sm:$0xff]
  %v26 = vld [vmem:[%s0 + $0x8] sm:$0xf]
  %v27 = vld [vmem:[%s2] sm:$0xff]
  %v28 = vld [vmem:[%s2 + $0x8] sm:$0xff]
  %v29 = vld [vmem:[%s2 + $0x10] sm:$0xff]
  %v30 = vld [vmem:[%s2 + $0x18] sm:$0xff]
  %32 = vset.pattern.permute.xlu0 0
  %33 = vperm.xlu0 %32, %v27
  %v34 = vpop.permute.xlu0 %33
  %37 = vset.pattern.permute.xlu0 0
  %38 = vperm.xlu0 %37, %v28
  %v39 = vpop.permute.xlu0 %38
  %42 = vset.pattern.permute.xlu0 0
  %43 = vperm.xlu0 %42, %v29
  %v44 = vpop.permute.xlu0 %43
  %47 = vset.pattern.permute.xlu0 0
  %48 = vperm.xlu0 %47, %v30
  %v49 = vpop.permute.xlu0 %48
  %vm51 = vcmask 97280
  %v53 = vsel %vm51, %v21, 0
  %v56 = vsel %vm51, %v22, 0
  %v59 = vsel %vm51, %v23, 0
  %v62 = vsel %vm51, %v24, 0
  %vm64 = vcmask 1043456
  %v66 = vsel %vm64, %v26, 0
  %68 = vmatprep.subr.mxu0 0.0
  %69 = vmatpush1.msra.mxu0 %v25
  %70 = vmatprep.subr.mxu0 0.0
  %71 = vmatpush1.msra.mxu0 %v66
  %72 = vmatprep.subr.mxu0 0.0
  %73 = vmatpush1.msra.mxu0 0.0
  %74 = vmatprep.subr.mxu0 0.0
  %75 = vmatpush1.msra.mxu0 0.0
  %76 = vmatprep.subr.mxu0 0.0
  %77 = vmatpush1.msra.mxu0 0.0
  %78 = vmatprep.subr.mxu0 0.0
  %79 = vmatpush1.msra.mxu0 0.0
  %80 = vmatprep.subr.mxu0 0.0
  %81 = vmatpush1.msra.mxu0 0.0
  %82 = vmatprep.subr.mxu0 0.0
  %83 = vmatpush1.msra.mxu0 0.0
  %84 = vmatprep.subr.mxu0 0.0
  %85 = vmatpush1.msra.mxu0 0.0
  %86 = vmatprep.subr.mxu0 0.0
  %87 = vmatpush1.msra.mxu0 0.0
  %88 = vmatprep.subr.mxu0 0.0
  %89 = vmatpush1.msra.mxu0 0.0
  %90 = vmatprep.subr.mxu0 0.0
  %91 = vmatpush1.msra.mxu0 0.0
  %92 = vmatprep.subr.mxu0 0.0
  %93 = vmatpush1.msra.mxu0 0.0
  %94 = vmatprep.subr.mxu0 0.0
  %95 = vmatpush1.msra.mxu0 0.0
  %96 = vmatprep.subr.mxu0 0.0
  %97 = vmatpush1.msra.mxu0 0.0
  %98 = vmatprep.subr.mxu0 0.0
  %99 = vmatpush1.msra.mxu0 0.0
  %100 = vmatprep.subr.mxu0 0.0
  %101 = vmatpush1.msra.mxu0 0.0
  %102 = vmatprep.subr.mxu0 0.0
  %103 = vmatpush1.msra.mxu0 0.0
  %104 = vmatprep.subr.mxu0 0.0
  %105 = vmatpush1.msra.mxu0 0.0
  %106 = vmatprep.subr.mxu0 0.0
  %107 = vmatpush1.msra.mxu0 0.0
  %108 = vmatprep.subr.mxu0 0.0
  %109 = vmatpush1.msra.mxu0 0.0
  %110 = vmatprep.subr.mxu0 0.0
  %111 = vmatpush1.msra.mxu0 0.0
  %112 = vmatprep.subr.mxu0 0.0
  %113 = vmatpush1.msra.mxu0 0.0
  %114 = vmatprep.subr.mxu0 0.0
  %115 = vmatpush1.msra.mxu0 0.0
  %116 = vmatprep.subr.mxu0 0.0
  %117 = vmatpush1.msra.mxu0 0.0
  %118 = vmatprep.subr.mxu0 0.0
  %119 = vmatpush1.msra.mxu0 0.0
  %120 = vmatprep.subr.mxu0 0.0
  %121 = vmatpush1.msra.mxu0 0.0
  %122 = vmatprep.subr.mxu0 0.0
  %123 = vmatpush1.msra.mxu0 0.0
  %124 = vmatprep.subr.mxu0 0.0
  %125 = vmatpush1.msra.mxu0 0.0
  %126 = vmatprep.subr.mxu0 0.0
  %127 = vmatpush1.msra.mxu0 0.0
  %128 = vmatprep.subr.mxu0 0.0
  %129 = vmatpush1.msra.mxu0 0.0
  %130 = vmatprep.subr.mxu0 0.0
  %131 = vmatpush1.msra.mxu0 0.0
  %132 = vmatprep.mubr.f32.mxu0 0.0
  %133 = vmatmul.mubr.f32.gmra.mrb[0].mxu0 %v53
  %v134 = vpop.f32.mrb[0].mxu0
  %v135 = vadd.f32 %v34, %v134
  %v136 = vpop.f32.mrb[0].mxu0
  %137 = vmatprep.mubr.f32.mxu0 0.0
  %138 = vmatmul.mubr.f32.gmra.mrb[0].mxu0 %v56
  %v139 = vpop.f32.mrb[0].mxu0
  %v140 = vadd.f32 %v39, %v139
  %v141 = vpop.f32.mrb[0].mxu0
  %142 = vmatprep.mubr.f32.mxu0 0.0
  %143 = vmatmul.mubr.f32.gmra.mrb[0].mxu0 %v59
  %v144 = vpop.f32.mrb[0].mxu0
  %v145 = vadd.f32 %v44, %v144
  %v146 = vpop.f32.mrb[0].mxu0
  %147 = vmatprep.mubr.f32.mxu0 0.0
  %148 = vmatmul.mubr.f32.gmra.mrb[0].mxu0 %v62
  %v149 = vpop.f32.mrb[0].mxu0
  %v150 = vadd.f32 %v49, %v149
  %v151 = vpop.f32.mrb[0].mxu0
  %152 = vdwg.mxu0
  %v153 = vmax.f32 %v135, 0.0
  %v154 = vmax.f32 %v140, 0.0
  %v155 = vmax.f32 %v145, 0.0
  %v156 = vmax.f32 %v150, 0.0
  %v157 = vld [vmem:[%s3] sm:$0xff]
  %v158 = vld [vmem:[%s3 + $0x8] sm:$0xff]
  %v159 = vld [vmem:[%s3 + $0x10] sm:$0xff]
  %v160 = vld [vmem:[%s3 + $0x18] sm:$0xff]
  %162 = vset.pattern.permute.xlu0 0
  %163 = vperm.xlu0 %162, %v157
  %v164 = vpop.permute.xlu0 %163
  %167 = vset.pattern.permute.xlu0 0
  %168 = vperm.xlu0 %167, %v158
  %v169 = vpop.permute.xlu0 %168
  %172 = vset.pattern.permute.xlu0 0
  %173 = vperm.xlu0 %172, %v159
  %v174 = vpop.permute.xlu0 %173
  %177 = vset.pattern.permute.xlu0 0
  %178 = vperm.xlu0 %177, %v160
  %v179 = vpop.permute.xlu0 %178
  %v181 = vmul.f32 %v153, %v164
  %v182 = vmul.f32 %v154, %v169
  %v183 = vmul.f32 %v155, %v174
  %v184 = vmul.f32 %v156, %v179
  %v185 = vadd.f32 %v181, %v182
  %v186 = vadd.f32 %v185, %v183
  %v187 = vadd.f32 %v186, %v184
  %v188 = vrot.slane %v187, 4
  %v189 = vadd.f32 %v187, %v188
  %v190 = vrot.slane %v189, 2
  %v191 = vadd.f32 %v189, %v190
  %v192 = vrot.slane %v191, 1
  %v193 = vadd.f32 %v191, %v192
  %s194 = sld [smem:[#allocation2]]
  %v195 = vstv %s194
  %v196 = vadd.f32 %v193, %v195
  %197 = vst [vmem:[%s5] sm:$0x1] %v196
  // Predicated region
  $region22: #{predictor_forward.1} parent=0 // pred_check
    _
  $region23: #{predictor_forward.1} parent=0 // pred_check_branch
    %199 = sbr.rel (0) target = $region25
  $region24: #{predictor_forward.1} parent=0 // pred_region
    _
  $region25: #{predictor_forward.1} parent=0 // pred_fallthru
    _
  // Predicated region
  $region26: #{predictor_forward.1} parent=0 // pred_check
    _
  $region27: #{predictor_forward.1} parent=0 // pred_check_branch
    %201 = sbr.rel (0) target = $region29
  $region28: #{predictor_forward.1} parent=0 // pred_region
    _
  $region29: #{predictor_forward.1} parent=0 // pred_fallthru
    _

</llo_original>
